<compile_context>
chip_gen: v7x
topology: tpu7x:2x2x1
jax: 0.10.0
libtpu: 0.0.40
codegen_flags: <defaults>
</compile_context>

<pallas_src>
import functools
import math

import jax
import jax.numpy as jnp
from jax.experimental import pallas as pl
from jax.experimental.pallas import tpu as pltpu


def _round_up(x, m):
    return ((x + m - 1) // m) * m


_MASK_NEG = -1e30  # additive bias for masked / padded sequence positions


def _attn_agg_kernel(embs_ref, mbias_ref, q_ref, wt_ref, b_ref, out_ref, *,
                     inv_sqrt_h, mxu_dtype):
    # embs_ref : (TB, S_pad, H_pad)  native dtype (f32 typical)   raw embeddings
    # mbias_ref: (TB, S_pad)         f32   0 (keep) / -1e30 (masked or padded)
    # q_ref    : (TB, H_pad)         f32
    # wt_ref   : (H_pad, H_pad)      mxu_dtype   W^T, so y = x @ wt
    # b_ref    : (1, H_pad)          f32
    # out_ref  : (TB, H_pad)         f32
    tb, s_p, h_p = embs_ref.shape
    embs = embs_ref[...]                                     # (TB, S, H)

    # Linear + Tanh: one big (TB*S, H) @ (H, H) MXU matmul.  The bf16 cast of the
    # activation tile happens in VMEM only (no HBM cost); f32 accumulation;
    # tanh and everything downstream stays f32 (safe on v5e).
    x = embs.reshape(tb * s_p, h_p).astype(mxu_dtype)
    hid = jnp.tanh(
        jnp.dot(x, wt_ref[...], preferred_element_type=jnp.float32) + b_ref[...]
    ).reshape(tb, s_p, h_p)                                  # (TB, S, H) f32

    # Attention logits: lane-axis reduce over H.
    logits = jnp.sum(hid * q_ref[...][:, None, :], axis=-1)  # (TB, S) f32

    # Masked, scaled softmax over the (lane) S axis.
    scaled = logits * inv_sqrt_h + mbias_ref[...]            # (TB, S)
    m = jnp.max(scaled, axis=-1, keepdims=True)              # (TB, 1)
    e = jnp.exp(scaled - m)                                  # (TB, S)
    denom = jnp.sum(e, axis=-1, keepdims=True)               # (TB, 1)
    score = e * pl.reciprocal(denom, approx=True)            # (TB, S)

    # Weighted sum of the *raw* embeddings (kept in their input dtype -> f32
    # parity for f32 inputs, bf16 VPU savings for bf16 inputs); sublane reduce
    # over S with f32 accumulation.
    attn = jnp.sum(score[:, :, None].astype(embs.dtype) * embs, axis=1,
                   dtype=jnp.float32)                        # (TB, H) f32
    out_ref[...] = attn.astype(out_ref.dtype)


def _tpu_hints():
    """Best-effort (physical_vmem_bytes, tensorcores_per_chip)."""
    vmem = 64 * 1024 * 1024   # conservative (v7x-sized) fallback
    n_tc = 1
    try:
        vmem = int(pltpu.get_tpu_info().vmem_capacity_bytes)
    except Exception:
        pass
    try:
        kind = jax.devices()[0].device_kind.lower()
        if "v7" in kind or "7x" in kind:
            n_tc = 2
    except Exception:
        pass
    return vmem, n_tc


def attentive_aggregation(embs, emb_mask, q, W, b, *, tb=None,
                          mxu_dtype=jnp.bfloat16):
    """embs: [B, S, H]; emb_mask: [B, S] bool; q: [B, H];
    W: [H, H] (PyTorch Linear weight, out x in); b: [H].  Returns: [B, H] f32.

    embs is consumed in its *native* dtype (no wrapper-side cast/copy); only the
    MXU matmul inputs are cast to `mxu_dtype` inside VMEM (f32 accumulation)."""
    B, S, H = embs.shape
    assert emb_mask.shape == (B, S)
    assert q.shape == (B, H) and W.shape == (H, H) and b.shape == (H,)

    f32 = jnp.float32
    emb_item = jnp.dtype(embs.dtype).itemsize
    H_pad = _round_up(H, 128)                      # lane-dense last dim
    s_align = 8 if emb_item >= 4 else (16 if emb_item == 2 else 32)
    S_pad = _round_up(S, s_align)                  # sublane pack for embs dtype
    b8 = _round_up(B, 8)

    vmem_phys, n_tc = _tpu_hints()

    # ---- VMEM-aware choice of TB (batch rows per grid step) ---------------------
    # Per-row bytes: double-buffered input tile (2*itemsize), bf16 MXU copy (2),
    # f32 hid (4), ~two transient f32 (TB,S,H) products (8), plus the small
    # double-buffered per-row tensors (mask bias, q, output).
    row_elems = S_pad * H_pad
    per_row = row_elems * (2 * emb_item + 2 + 4 + 8) \
        + 2 * (S_pad * 4 + 2 * H_pad * 4)
    # Resident (constant-index-map) W^T (2x-buffered) + bias.
    fixed = 2 * H_pad * H_pad * jnp.dtype(mxu_dtype).itemsize + 2 * H_pad * 4

    # Generation-aware budget: ~32 MiB on 128 MiB-VMEM chips (v5e/v6e),
    # ~16 MiB on v7x's 64 MiB physical VMEM.
    budget = min(max(vmem_phys // 4, 8 << 20), 32 << 20)

    if tb is None:
        tb = max(8, ((budget - fixed) // max(per_row, 1)) // 8 * 8)
    tb = max(8, (int(tb) // 8) * 8)                # multiple of 8 (sublane tile)
    tb = min(tb, b8)
    if n_tc > 1 and b8 >= 8 * 2 * n_tc:
        # Multi-TC chips (v7x): keep >= 2*n_tc grid steps so both TensorCores
        # get balanced work.  Single-TC chips keep the single largest tile.
        tb = min(tb, max(8, ((b8 // (2 * n_tc)) // 8) * 8))
    B_pad = _round_up(B, tb)
    grid = (B_pad // tb,)

    vmem_limit = int(min(vmem_phys * 3 // 4, fixed + tb * per_row + (8 << 20)))
    vmem_limit = max(vmem_limit, 32 << 20)
    vmem_limit = min(vmem_limit, vmem_phys)

    # ---- guarded padding (no dtype cast of embs; no-ops when already aligned) ----
    if (B_pad, S_pad, H_pad) != (B, S, H):
        embs_in = jnp.pad(embs, ((0, B_pad - B), (0, S_pad - S), (0, H_pad - H)))
    else:
        embs_in = embs

    mbias = jnp.where(emb_mask, 0.0, _MASK_NEG).astype(f32)
    if (B_pad, S_pad) != (B, S):
        mbias = jnp.pad(mbias, ((0, B_pad - B), (0, S_pad - S)),
                        constant_values=_MASK_NEG)

    q_in = q.astype(f32)
    if (B_pad, H_pad) != (B, H):
        q_in = jnp.pad(q_in, ((0, B_pad - B), (0, H_pad - H)))

    wt = W.T.astype(mxu_dtype)
    b_in = b.astype(f32)
    if H_pad != H:
        wt = jnp.pad(wt, ((0, H_pad - H), (0, H_pad - H)))
        b_in = jnp.pad(b_in, (0, H_pad - H))
    b_in = b_in.reshape(1, H_pad)

    kernel = functools.partial(_attn_agg_kernel,
                               inv_sqrt_h=1.0 / math.sqrt(float(H)),
                               mxu_dtype=mxu_dtype)

    out = pl.pallas_call(
        kernel,
        out_shape=jax.ShapeDtypeStruct((B_pad, H_pad), f32),
        grid_spec=pltpu.PrefetchScalarGridSpec(
            num_scalar_prefetch=0,
            grid=grid,
            in_specs=[
                pl.BlockSpec((tb, S_pad, H_pad), lambda i: (i, 0, 0)),  # embs
                pl.BlockSpec((tb, S_pad), lambda i: (i, 0)),            # mask bias
                pl.BlockSpec((tb, H_pad), lambda i: (i, 0)),            # q
                pl.BlockSpec((H_pad, H_pad), lambda i: (0, 0)),         # W^T (resident)
                pl.BlockSpec((1, H_pad), lambda i: (0, 0)),             # bias (resident)
            ],
            out_specs=pl.BlockSpec((tb, H_pad), lambda i: (i, 0)),
        ),
        compiler_params=pltpu.CompilerParams(
            dimension_semantics=("parallel",),
            vmem_limit_bytes=int(vmem_limit),
        ),
    )(embs_in, mbias, q_in, wt, b_in)

    if (B_pad, H_pad) != (B, H):
        out = out[:B, :H]
    return out


def _reference(embs, emb_mask, q, W, b, matmul_dtype=jnp.float32):
    """Pure-JAX port of the PyTorch module.  matmul_dtype emulates the kernel's
    reduced-precision MXU inputs when set to bf16; the final weighted sum always
    uses the raw f32 embeddings (matching the kernel)."""
    H = q.shape[1]
    e_mm = embs.astype(matmul_dtype).astype(jnp.float32)
    w_mm = W.astype(matmul_dtype).astype(jnp.float32)
    h = jnp.tanh(jnp.einsum("bsh,oh->bso", e_mm, w_mm) + b)
    logit = jnp.sum(h * q[:, None, :], axis=2)
    logit = jnp.where(emb_mask, logit, -jnp.inf)
    score = jax.nn.softmax(logit / jnp.sqrt(jnp.float32(H)), axis=1)
    return jnp.sum(score[:, :, None] * embs.astype(jnp.float32), axis=1)


if __name__ == "__main__":
    B, S, H = 16, 8, 32  # batch, num_seq, hidden_size (small demo shapes)

    key = jax.random.PRNGKey(0)
    k_embs, k_q, k_w, k_b, k_m = jax.random.split(key, 5)

    embs = jax.random.normal(k_embs, (B, S, H), dtype=jnp.float32)
    q = jax.random.normal(k_q, (B, H), dtype=jnp.float32)

    # PyTorch-style Linear(input_size, input_size) uniform init.
    bound = 1.0 / math.sqrt(H)
    W = jax.random.uniform(k_w, (H, H), minval=-bound, maxval=bound, dtype=jnp.float32)
    b = jax.random.uniform(k_b, (H,), minval=-bound, maxval=bound, dtype=jnp.float32)

    # Mask with some positions off; guarantee at least one valid position per row
    # (all-masked rows are a documented precondition of the original module too).
    emb_mask = jax.random.uniform(k_m, (B, S)) > 0.3
    emb_mask = emb_mask.at[:, 0].set(True)

    out = attentive_aggregation(embs, emb_mask, q, W, b)
    out = jax.block_until_ready(out)
    assert out.shape == (B, H)

    # Tight check against a reference that matches the kernel's bf16 MXU inputs
    # (same math otherwise; remaining delta is approx-reciprocal + fp ordering).
    ref_bf16 = _reference(embs, emb_mask, q, W, b, matmul_dtype=jnp.bfloat16)
    assert jnp.allclose(out, ref_bf16, atol=3e-3, rtol=3e-3), \
        "mismatch vs bf16-matmul-matched reference"

    # Looser check against the exact f32 PyTorch semantics (bf16 MXU inputs shift
    # the logits / softmax slightly).
    ref_f32 = _reference(embs, emb_mask, q, W, b)
    assert jnp.allclose(out, ref_f32, atol=5e-2, rtol=5e-2), \
        "mismatch vs f32 reference"

    print("KERNEL_OK")
</pallas_src>

<mosaic_0001>
module attributes {stable_mosaic.version = 11 : i64} {
  func.func @_attn_agg_kernel(%arg0: i32, %arg1: memref<16x8x128xf32, #tpu.memory_space<vmem>>, %arg2: memref<16x8xf32, #tpu.memory_space<vmem>>, %arg3: memref<16x128xf32, #tpu.memory_space<vmem>>, %arg4: memref<128x128xbf16, #tpu.memory_space<vmem>>, %arg5: memref<1x128xf32, #tpu.memory_space<vmem>>, %arg6: memref<16x128xf32, #tpu.memory_space<vmem>>) attributes {dimension_semantics = [#tpu.dimension_semantics<parallel>], iteration_bounds = array<i64: 1>, scalar_prefetch = 0 : i64, scratch_operands = 0 : i64, tpu.core_type = #tpu.core_type<tc>, window_params = [{transform_indices = @transform_0, window_bounds = array<i64: 16, 8, 128>}, {transform_indices = @transform_1, window_bounds = array<i64: 16, 8>}, {transform_indices = @transform_2, window_bounds = array<i64: 16, 128>}, {pipeline_mode = #tpu.pipeline_mode<synchronous>, transform_indices = @transform_3, window_bounds = array<i64: 128, 128>}, {pipeline_mode = #tpu.pipeline_mode<synchronous>, transform_indices = @transform_4, window_bounds = array<i64: 1, 128>}, {transform_indices = @transform_5, window_bounds = array<i64: 16, 128>}]} {
    %c0 = arith.constant 0 : index
    %c0_0 = arith.constant 0 : index
    %c0_1 = arith.constant 0 : index
    %0 = vector.load %arg1[%c0, %c0_0, %c0_1] : memref<16x8x128xf32, #tpu.memory_space<vmem>>, vector<16x8x128xf32>
    %1 = vector.shape_cast %0 : vector<16x8x128xf32> to vector<128x128xf32>
    %2 = arith.truncf %1 : vector<128x128xf32> to vector<128x128xbf16>
    %c0_2 = arith.constant 0 : index
    %c0_3 = arith.constant 0 : index
    %3 = vector.load %arg4[%c0_2, %c0_3] : memref<128x128xbf16, #tpu.memory_space<vmem>>, vector<128x128xbf16>
    %cst = arith.constant dense<0.000000e+00> : vector<128x128xf32>
    %4 = tpu.matmul %2, %3, %cst {dimension_numbers = #tpu.dot_dimension_numbers<[1], [0], [0], [1], [0, 0, 1, 1], [], []>} : vector<128x128xbf16>, vector<128x128xbf16>, vector<128x128xf32> -> vector<128x128xf32>
    %c0_4 = arith.constant 0 : index
    %c0_5 = arith.constant 0 : index
    %5 = vector.load %arg5[%c0_4, %c0_5] : memref<1x128xf32, #tpu.memory_space<vmem>>, vector<1x128xf32>
    %6 = vector.broadcast %5 : vector<1x128xf32> to vector<128x128xf32>
    %7 = arith.addf %4, %6 : vector<128x128xf32>
    %8 = math.tanh %7 : vector<128x128xf32>
    %9 = vector.shape_cast %8 : vector<128x128xf32> to vector<16x8x128xf32>
    %c0_6 = arith.constant 0 : index
    %c0_7 = arith.constant 0 : index
    %10 = vector.load %arg3[%c0_6, %c0_7] : memref<16x128xf32, #tpu.memory_space<vmem>>, vector<16x128xf32>
    %11 = vector.shape_cast %10 : vector<16x128xf32> to vector<16x1x128xf32>
    %12 = vector.broadcast %11 : vector<16x1x128xf32> to vector<16x8x128xf32>
    %13 = arith.mulf %9, %12 : vector<16x8x128xf32>
    %cst_8 = arith.constant dense<0.000000e+00> : vector<16x8xf32>
    %14 = vector.multi_reduction <add>, %13, %cst_8 [2] : vector<16x8x128xf32> to vector<16x8xf32>
    %cst_9 = arith.constant 0.176776692 : f32
    %15 = vector.broadcast %cst_9 : f32 to vector<16x8xf32>
    %16 = arith.mulf %14, %15 : vector<16x8xf32>
    %c0_10 = arith.constant 0 : index
    %c0_11 = arith.constant 0 : index
    %17 = vector.load %arg2[%c0_10, %c0_11] : memref<16x8xf32, #tpu.memory_space<vmem>>, vector<16x8xf32>
    %18 = arith.addf %16, %17 : vector<16x8xf32>
    %cst_12 = arith.constant dense<0xFF800000> : vector<16xf32>
    %19 = vector.multi_reduction <maximumf>, %18, %cst_12 [1] : vector<16x8xf32> to vector<16xf32>
    %20 = vector.shape_cast %19 : vector<16xf32> to vector<16x1xf32>
    %21 = vector.broadcast %20 : vector<16x1xf32> to vector<16x8xf32>
    %22 = arith.subf %18, %21 : vector<16x8xf32>
    %23 = math.exp %22 : vector<16x8xf32>
    %cst_13 = arith.constant dense<0.000000e+00> : vector<16xf32>
    %24 = vector.multi_reduction <add>, %23, %cst_13 [1] : vector<16x8xf32> to vector<16xf32>
    %25 = vector.shape_cast %24 : vector<16xf32> to vector<16x1xf32>
    %26 = tpu.reciprocal %25 {approx = true} : vector<16x1xf32> -> vector<16x1xf32>
    %27 = vector.broadcast %26 : vector<16x1xf32> to vector<16x8xf32>
    %28 = arith.mulf %23, %27 : vector<16x8xf32>
    %29 = vector.shape_cast %28 : vector<16x8xf32> to vector<16x8x1xf32>
    %30 = vector.broadcast %29 : vector<16x8x1xf32> to vector<16x8x128xf32>
    %31 = arith.mulf %30, %0 : vector<16x8x128xf32>
    %cst_14 = arith.constant dense<0.000000e+00> : vector<16x128xf32>
    %32 = vector.multi_reduction <add>, %31, %cst_14 [1] : vector<16x8x128xf32> to vector<16x128xf32>
    %c0_15 = arith.constant 0 : index
    %c0_16 = arith.constant 0 : index
    %33 = vector.load %arg6[%c0_15, %c0_16] : memref<16x128xf32, #tpu.memory_space<vmem>>, vector<16x128xf32>
    tpu.vector_store %arg6[%c0_15, %c0_16], %32 {strides = array<i32>} : memref<16x128xf32, #tpu.memory_space<vmem>>, vector<16x128xf32>,
    return
  }
  func.func @transform_0(%arg0: i32) -> (i32, i32, i32) {
    %c0_i32 = arith.constant 0 : i32
    %c0_i32_0 = arith.constant 0 : i32
    %c0_i32_1 = arith.constant 0 : i32
    return %arg0, %c0_i32, %c0_i32_0 : i32, i32, i32
  }
  func.func @transform_1(%arg0: i32) -> (i32, i32) {
    %c0_i32 = arith.constant 0 : i32
    %c0_i32_0 = arith.constant 0 : i32
    return %arg0, %c0_i32 : i32, i32
  }
  func.func @transform_2(%arg0: i32) -> (i32, i32) {
    %c0_i32 = arith.constant 0 : i32
    %c0_i32_0 = arith.constant 0 : i32
    return %arg0, %c0_i32 : i32, i32
  }
  func.func @transform_3(%arg0: i32) -> (i32, i32) {
    %c0_i32 = arith.constant 0 : i32
    %c0_i32_0 = arith.constant 0 : i32
    %c0_i32_1 = arith.constant 0 : i32
    return %c0_i32, %c0_i32_0 : i32, i32
  }
  func.func @transform_4(%arg0: i32) -> (i32, i32) {
    %c0_i32 = arith.constant 0 : i32
    %c0_i32_0 = arith.constant 0 : i32
    %c0_i32_1 = arith.constant 0 : i32
    return %c0_i32, %c0_i32_0 : i32, i32
  }
  func.func @transform_5(%arg0: i32) -> (i32, i32) {
    %c0_i32 = arith.constant 0 : i32
    %c0_i32_0 = arith.constant 0 : i32
    return %arg0, %c0_i32 : i32, i32
  }
}

</mosaic_0001>

<llo_original>
// kernel: tpu_custom_call.1
$region0: #{tpu_custom_call.1}
  #allocation0 [shape = 'u32[]', space=smem, size = 0x4, offset = 0x4, fixed_abs, tag = 'smem constant byte address 0x4 - core index']
  #allocation1 [shape = 'u32[144,128]{1,0:T(1,128)}', space=vmem, size = 0x12000, scoped, tag = 'internal scratch']
  %s0 = inlined_call_operand.hbm [shape: f32[16,8,128], index: 0, kind: input, shape index: {}]
  %s1 = inlined_call_operand.vmem [shape: f32[16,8], index: 1, kind: input, shape index: {}]
  %s2 = inlined_call_operand.vmem [shape: f32[16,128], index: 2, kind: input, shape index: {}]
  %s3 = inlined_call_operand.hbm [shape: bf16[128,128], index: 3, kind: input, shape index: {}]
  %s4 = inlined_call_operand.vmem [shape: f32[1,128], index: 4, kind: input, shape index: {}]
  %s5 = inlined_call_operand.hbm [shape: f32[16,128], index: 5, kind: output, shape index: {}]
  %s6 = sld [smem:[#allocation0]]
  $region38: #{tpu_custom_call.1} parent=0
    _
  %s8 = ssub.s32 1, %s6
  %s9 = scalar_select 0, %s8, %s6
  $region1: #{tpu_custom_call.1} parent=0
    #allocation2 [shape = 'u8[65536]{0}', space=vmem, size = 0x10000, scoped, tag = 'input window, operand 0, single buffered']
    #allocation3 [shape = 's32[1]{0}', space=sflag, size = 0x4, scoped, tag = 'scoped memory for tpu_custom_call.1']
    #allocation4 [shape = 's32[1]{0}', space=sflag, size = 0x4, scoped, tag = 'scoped memory for tpu_custom_call.1']
    #allocation5 [shape = 'u8[32768]{0}', space=vmem, size = 0x8000, scoped, tag = 'input window, operand 3, single buffered']
    #allocation6 [shape = 's32[1]{0}', space=sflag, size = 0x4, scoped, tag = 'scoped memory for tpu_custom_call.1']
    #allocation7 [shape = 'u8[8192]{0}', space=vmem, size = 0x2000, scoped, tag = 'output window, operand 0, single buffered']
    %10 = vsyncpa [#allocation3], 0
    %11 = vsyncpa [#allocation6], 0
    %12 = vsyncpa [#allocation4], 0
    // Predicated region
    $region2: #{tpu_custom_call.1} parent=1 // pred_check
      _
    $region3: #{tpu_custom_call.1} parent=1 // pred_check_branch
      %14 = sbr.rel (0) target = $region5
    $region4: #{tpu_custom_call.1} parent=1 // pred_region
      %s16 = ssub.s32 2048, 2048
      %17 = vsyncadd [#allocation3], %s16
      %s18 = sshll.u32 [#allocation2], 4
      %s19 = int_to_ptr.vmem [resolvable:$true] %s18
      %24 = dma.hbm_to_vmem [thread:$0]  %s0, 2048, %s19, [#allocation3], 128, 128, 8
    $region5: #{tpu_custom_call.1} parent=1 // pred_fallthru
      _
    // Predicated region
    $region6: #{tpu_custom_call.1} parent=1 // pred_check
      _
    $region7: #{tpu_custom_call.1} parent=1 // pred_check_branch
      %26 = sbr.rel (0) target = $region9
    $region8: #{tpu_custom_call.1} parent=1 // pred_region
      _
    $region9: #{tpu_custom_call.1} parent=1 // pred_fallthru
      _
    // Predicated region
    $region10: #{tpu_custom_call.1} parent=1 // pred_check
      _
    $region11: #{tpu_custom_call.1} parent=1 // pred_check_branch
      %28 = sbr.rel (0) target = $region13
    $region12: #{tpu_custom_call.1} parent=1 // pred_region
      _
    $region13: #{tpu_custom_call.1} parent=1 // pred_fallthru
      _
    // Predicated region
    $region14: #{tpu_custom_call.1} parent=1 // pred_check
      _
    $region15: #{tpu_custom_call.1} parent=1 // pred_check_branch
      %30 = sbr.rel (0) target = $region17
    $region16: #{tpu_custom_call.1} parent=1 // pred_region
      %s32 = ssub.s32 1024, 1024
      %33 = vsyncadd [#allocation6], %s32
      %s34 = sshll.u32 [#allocation5], 4
      %s35 = int_to_ptr.vmem [resolvable:$true] %s34
      %40 = dma.hbm_to_vmem [thread:$0]  %s3, 1024, %s35, [#allocation6], 64, 64, 4
    $region17: #{tpu_custom_call.1} parent=1 // pred_fallthru
      _
    // Predicated region
    $region18: #{tpu_custom_call.1} parent=1 // pred_check
      _
    $region19: #{tpu_custom_call.1} parent=1 // pred_check_branch
      %42 = sbr.rel (0) target = $region21
    $region20: #{tpu_custom_call.1} parent=1 // pred_region
      _
    $region21: #{tpu_custom_call.1} parent=1 // pred_fallthru
      _
    // Predicated region
    $region22: #{tpu_custom_call.1} parent=1 // pred_check
      _
    $region23: #{tpu_custom_call.1} parent=1 // pred_check_branch
      %44 = sbr.rel (0) target = $region25
    $region24: #{tpu_custom_call.1} parent=1 // pred_region
      %45 = dma.done [#allocation3], 2048
    $region25: #{tpu_custom_call.1} parent=1 // pred_fallthru
      _
    // Predicated region
    $region26: #{tpu_custom_call.1} parent=1 // pred_check
      _
    $region27: #{tpu_custom_call.1} parent=1 // pred_check_branch
      %47 = sbr.rel (0) target = $region29
    $region28: #{tpu_custom_call.1} parent=1 // pred_region
      %48 = dma.done [#allocation6], 1024
    $region29: #{tpu_custom_call.1} parent=1 // pred_fallthru
      _
    %v50 = vld [vmem:[#allocation2] sm:$0xff]
    %v51 = vld [vmem:[#allocation2 + $0x8] sm:$0xff]
    %v52 = vld [vmem:[#allocation2 + $0x10] sm:$0xff]
    %v53 = vld [vmem:[#allocation2 + $0x18] sm:$0xff]
    %v54 = vld [vmem:[#allocation2 + $0x20] sm:$0xff]
    %v55 = vld [vmem:[#allocation2 + $0x28] sm:$0xff]
    %v56 = vld [vmem:[#allocation2 + $0x30] sm:$0xff]
    %v57 = vld [vmem:[#allocation2 + $0x38] sm:$0xff]
    %v58 = vld [vmem:[#allocation2 + $0x40] sm:$0xff]
    %v59 = vld [vmem:[#allocation2 + $0x48] sm:$0xff]
    %v60 = vld [vmem:[#allocation2 + $0x50] sm:$0xff]
    %v61 = vld [vmem:[#allocation2 + $0x58] sm:$0xff]
    %v62 = vld [vmem:[#allocation2 + $0x60] sm:$0xff]
    %v63 = vld [vmem:[#allocation2 + $0x68] sm:$0xff]
    %v64 = vld [vmem:[#allocation2 + $0x70] sm:$0xff]
    %v65 = vld [vmem:[#allocation2 + $0x78] sm:$0xff]
    %v66 = vpack.c.bf16 %v51, %v50
    %v67 = vpack.c.bf16 %v53, %v52
    %v68 = vpack.c.bf16 %v55, %v54
    %v69 = vpack.c.bf16 %v57, %v56
    %v70 = vpack.c.bf16 %v59, %v58
    %v71 = vpack.c.bf16 %v61, %v60
    %v72 = vpack.c.bf16 %v63, %v62
    %v73 = vpack.c.bf16 %v65, %v64
    %v74 = vld [vmem:[#allocation5] sm:$0xf]
    %v75 = vld [vmem:[#allocation5 + $0x4] sm:$0xf]
    %v76 = vld [vmem:[#allocation5 + $0x8] sm:$0xf]
    %v77 = vld [vmem:[#allocation5 + $0xc] sm:$0xf]
    %v78 = vld [vmem:[#allocation5 + $0x10] sm:$0xf]
    %v79 = vld [vmem:[#allocation5 + $0x14] sm:$0xf]
    %v80 = vld [vmem:[#allocation5 + $0x18] sm:$0xf]
    %v81 = vld [vmem:[#allocation5 + $0x1c] sm:$0xf]
    %v82 = vld [vmem:[#allocation5 + $0x20] sm:$0xf]
    %v83 = vld [vmem:[#allocation5 + $0x24] sm:$0xf]
    %v84 = vld [vmem:[#allocation5 + $0x28] sm:$0xf]
    %v85 = vld [vmem:[#allocation5 + $0x2c] sm:$0xf]
    %v86 = vld [vmem:[#allocation5 + $0x30] sm:$0xf]
    %v87 = vld [vmem:[#allocation5 + $0x34] sm:$0xf]
    %v88 = vld [vmem:[#allocation5 + $0x38] sm:$0xf]
    %v89 = vld [vmem:[#allocation5 + $0x3c] sm:$0xf]
    %v90 = vld [vmem:[%s4] sm:$0x1]
    %v92 = vlaneseq
    %v93 = vshrl.u32 %v92, 7
    %v94 = vsub.s32 0, %v93
    %v95 = vrot.slane %v90, %v94
    %v113 = vunpack.c.l.b16 %v74
    %v114 = vunpack.c.l.b16 %v75
    %v115 = vunpack.c.l.b16 %v76
    %v116 = vunpack.c.l.b16 %v77
    %v117 = vunpack.c.l.b16 %v78
    %v118 = vunpack.c.l.b16 %v79
    %v119 = vunpack.c.l.b16 %v80
    %v120 = vunpack.c.l.b16 %v81
    %v121 = vunpack.c.l.b16 %v82
    %v122 = vunpack.c.l.b16 %v83
    %v123 = vunpack.c.l.b16 %v84
    %v124 = vunpack.c.l.b16 %v85
    %v125 = vunpack.c.l.b16 %v86
    %v126 = vunpack.c.l.b16 %v87
    %v127 = vunpack.c.l.b16 %v88
    %v128 = vunpack.c.l.b16 %v89
    %v129 = vpack.c.b16 %v114, %v113
    %v130 = vpack.c.b16 %v116, %v115
    %v131 = vpack.c.b16 %v118, %v117
    %v132 = vpack.c.b16 %v120, %v119
    %v133 = vpack.c.b16 %v122, %v121
    %v134 = vpack.c.b16 %v124, %v123
    %v135 = vpack.c.b16 %v126, %v125
    %v136 = vpack.c.b16 %v128, %v127
    %145 = vmatprep.subr.bf16.mxu0 0
    %146 = vmatpush1.bf16.msra.mxu0 %v129
    %147 = vmatprep.subr.bf16.mxu0 0
    %148 = vmatpush1.bf16.msra.mxu0 %v130
    %149 = vmatprep.subr.bf16.mxu0 0
    %150 = vmatpush1.bf16.msra.mxu0 %v131
    %151 = vmatprep.subr.bf16.mxu0 0
    %152 = vmatpush1.bf16.msra.mxu0 %v132
    %153 = vmatprep.subr.bf16.mxu0 0
    %154 = vmatpush1.bf16.msra.mxu0 %v133
    %155 = vmatprep.subr.bf16.mxu0 0
    %156 = vmatpush1.bf16.msra.mxu0 %v134
    %157 = vmatprep.subr.bf16.mxu0 0
    %158 = vmatpush1.bf16.msra.mxu0 %v135
    %159 = vmatprep.subr.bf16.mxu0 0
    %160 = vmatpush1.bf16.msra.mxu0 %v136
    %161 = vmatprep.subr.bf16.mxu0 0
    %162 = vmatpush1.bf16.msra.mxu0 0
    %163 = vmatprep.subr.bf16.mxu0 0
    %164 = vmatpush1.bf16.msra.mxu0 0
    %165 = vmatprep.subr.bf16.mxu0 0
    %166 = vmatpush1.bf16.msra.mxu0 0
    %167 = vmatprep.subr.bf16.mxu0 0
    %168 = vmatpush1.bf16.msra.mxu0 0
    %169 = vmatprep.subr.bf16.mxu0 0
    %170 = vmatpush1.bf16.msra.mxu0 0
    %171 = vmatprep.subr.bf16.mxu0 0
    %172 = vmatpush1.bf16.msra.mxu0 0
    %173 = vmatprep.subr.bf16.mxu0 0
    %174 = vmatpush1.bf16.msra.mxu0 0
    %175 = vmatprep.subr.bf16.mxu0 0
    %176 = vmatpush1.bf16.msra.mxu0 0
    %177 = vmatprep.mubr.bf16.mxu0 0
    %178 = vmatmul.mubr.bf16.gmra.mrb[0].mxu0 %v66
    %v179 = vpop.f32.mrb[0].mxu0
    %v180 = vadd.f32 %v95, %v179
    %v181 = vpop.f32.mrb[0].mxu0
    %v182 = vpop.f32.mrb[0].mxu0
    %v183 = vadd.f32 %v95, %v182
    %v184 = vpop.f32.mrb[0].mxu0
    %185 = vmatprep.mubr.bf16.mxu0 0
    %186 = vmatmul.mubr.bf16.gmra.mrb[0].mxu0 %v67
    %v187 = vpop.f32.mrb[0].mxu0
    %v188 = vadd.f32 %v95, %v187
    %v189 = vpop.f32.mrb[0].mxu0
    %v190 = vpop.f32.mrb[0].mxu0
    %v191 = vadd.f32 %v95, %v190
    %v192 = vpop.f32.mrb[0].mxu0
    %193 = vmatprep.mubr.bf16.mxu0 0
    %194 = vmatmul.mubr.bf16.gmra.mrb[0].mxu0 %v68
    %v195 = vpop.f32.mrb[0].mxu0
    %v196 = vadd.f32 %v95, %v195
    %v197 = vpop.f32.mrb[0].mxu0
    %v198 = vpop.f32.mrb[0].mxu0
    %v199 = vadd.f32 %v95, %v198
    %v200 = vpop.f32.mrb[0].mxu0
    %201 = vmatprep.mubr.bf16.mxu0 0
    %202 = vmatmul.mubr.bf16.gmra.mrb[0].mxu0 %v69
    %v203 = vpop.f32.mrb[0].mxu0
    %v204 = vadd.f32 %v95, %v203
    %v205 = vpop.f32.mrb[0].mxu0
    %v206 = vpop.f32.mrb[0].mxu0
    %v207 = vadd.f32 %v95, %v206
    %v208 = vpop.f32.mrb[0].mxu0
    %209 = vmatprep.mubr.bf16.mxu0 0
    %210 = vmatmul.mubr.bf16.gmra.mrb[0].mxu0 %v70
    %v211 = vpop.f32.mrb[0].mxu0
    %v212 = vadd.f32 %v95, %v211
    %v213 = vpop.f32.mrb[0].mxu0
    %v214 = vpop.f32.mrb[0].mxu0
    %v215 = vadd.f32 %v95, %v214
    %v216 = vpop.f32.mrb[0].mxu0
    %217 = vmatprep.mubr.bf16.mxu0 0
    %218 = vmatmul.mubr.bf16.gmra.mrb[0].mxu0 %v71
    %v219 = vpop.f32.mrb[0].mxu0
    %v220 = vadd.f32 %v95, %v219
    %v221 = vpop.f32.mrb[0].mxu0
    %v222 = vpop.f32.mrb[0].mxu0
    %v223 = vadd.f32 %v95, %v222
    %v224 = vpop.f32.mrb[0].mxu0
    %225 = vmatprep.mubr.bf16.mxu0 0
    %226 = vmatmul.mubr.bf16.gmra.mrb[0].mxu0 %v72
    %v227 = vpop.f32.mrb[0].mxu0
    %v228 = vadd.f32 %v95, %v227
    %v229 = vpop.f32.mrb[0].mxu0
    %v230 = vpop.f32.mrb[0].mxu0
    %v231 = vadd.f32 %v95, %v230
    %v232 = vpop.f32.mrb[0].mxu0
    %233 = vmatprep.mubr.bf16.mxu0 0
    %234 = vmatmul.mubr.bf16.gmra.mrb[0].mxu0 %v73
    %v235 = vpop.f32.mrb[0].mxu0
    %v236 = vadd.f32 %v95, %v235
    %v237 = vpop.f32.mrb[0].mxu0
    %v238 = vpop.f32.mrb[0].mxu0
    %v239 = vadd.f32 %v95, %v238
    %v240 = vpop.f32.mrb[0].mxu0
    %241 = vdwg.mxu0
    %v242 = vtanh.pop %v180
    %v243 = vtanh.pop %v183
    %v244 = vtanh.pop %v188
    %v245 = vtanh.pop %v191
    %v246 = vtanh.pop %v196
    %v247 = vtanh.pop %v199
    %v248 = vtanh.pop %v204
    %v249 = vtanh.pop %v207
    %v250 = vtanh.pop %v212
    %v251 = vtanh.pop %v215
    %v252 = vtanh.pop %v220
    %v253 = vtanh.pop %v223
    %v254 = vtanh.pop %v228
    %v255 = vtanh.pop %v231
    %v256 = vtanh.pop %v236
    %v257 = vtanh.pop %v239
    %v258 = vld [vmem:[%s2] sm:$0xff]
    %v259 = vld [vmem:[%s2 + $0x8] sm:$0xff]
    %v262 = vcombine.high %v258, %v258
    %v264 = vunpack.c.l.s4 1966171168
    %v265 = vunpack.c.0.s8 %v264
    %v266 = vlaneseq
    %v267 = vshrl.u32 %v266, 7
    %v268 = vsub.s32 %v265, %v267
    %v269 = vrot.slane %v258, %v268
    %v271 = vunpack.c.l.s4 1966171168
    %v272 = vunpack.c.0.s8 %v271
    %v273 = vlaneseq
    %v274 = vshrl.u32 %v273, 7
    %v275 = vsub.s32 %v272, %v274
    %v276 = vrot.slane %v262, %v275
    %v277 = vcombine.high %v269, %v269
    %v278 = vcombine.high %v276, %v276
    %v280 = vunpack.c.l.s4 1966171168
    %v281 = vunpack.c.0.s8 %v280
    %v282 = vlaneseq
    %v283 = vshrl.u32 %v282, 7
    %v284 = vsub.s32 %v281, %v283
    %v285 = vrot.slane %v269, %v284
    %v287 = vunpack.c.l.s4 1966171168
    %v288 = vunpack.c.0.s8 %v287
    %v289 = vlaneseq
    %v290 = vshrl.u32 %v289, 7
    %v291 = vsub.s32 %v288, %v290
    %v292 = vrot.slane %v276, %v291
    %v294 = vunpack.c.l.s4 1966171168
    %v295 = vunpack.c.0.s8 %v294
    %v296 = vlaneseq
    %v297 = vshrl.u32 %v296, 7
    %v298 = vsub.s32 %v295, %v297
    %v299 = vrot.slane %v277, %v298
    %v301 = vunpack.c.l.s4 1966171168
    %v302 = vunpack.c.0.s8 %v301
    %v303 = vlaneseq
    %v304 = vshrl.u32 %v303, 7
    %v305 = vsub.s32 %v302, %v304
    %v306 = vrot.slane %v278, %v305
    %v307 = vcombine.high %v285, %v285
    %v308 = vcombine.high %v292, %v292
    %v309 = vcombine.high %v299, %v299
    %v310 = vcombine.high %v306, %v306
    %v311 = vcombine.high %v259, %v259
    %v313 = vunpack.c.l.s4 1966171168
    %v314 = vunpack.c.0.s8 %v313
    %v315 = vlaneseq
    %v316 = vshrl.u32 %v315, 7
    %v317 = vsub.s32 %v314, %v316
    %v318 = vrot.slane %v259, %v317
    %v320 = vunpack.c.l.s4 1966171168
    %v321 = vunpack.c.0.s8 %v320
    %v322 = vlaneseq
    %v323 = vshrl.u32 %v322, 7
    %v324 = vsub.s32 %v321, %v323
    %v325 = vrot.slane %v311, %v324
    %v326 = vcombine.high %v318, %v318
    %v327 = vcombine.high %v325, %v325
    %v329 = vunpack.c.l.s4 1966171168
    %v330 = vunpack.c.0.s8 %v329
    %v331 = vlaneseq
    %v332 = vshrl.u32 %v331, 7
    %v333 = vsub.s32 %v330, %v332
    %v334 = vrot.slane %v318, %v333
    %v336 = vunpack.c.l.s4 1966171168
    %v337 = vunpack.c.0.s8 %v336
    %v338 = vlaneseq
    %v339 = vshrl.u32 %v338, 7
    %v340 = vsub.s32 %v337, %v339
    %v341 = vrot.slane %v325, %v340
    %v343 = vunpack.c.l.s4 1966171168
    %v344 = vunpack.c.0.s8 %v343
    %v345 = vlaneseq
    %v346 = vshrl.u32 %v345, 7
    %v347 = vsub.s32 %v344, %v346
    %v348 = vrot.slane %v326, %v347
    %v350 = vunpack.c.l.s4 1966171168
    %v351 = vunpack.c.0.s8 %v350
    %v352 = vlaneseq
    %v353 = vshrl.u32 %v352, 7
    %v354 = vsub.s32 %v351, %v353
    %v355 = vrot.slane %v327, %v354
    %v356 = vcombine.high %v334, %v334
    %v357 = vcombine.high %v341, %v341
    %v358 = vcombine.high %v348, %v348
    %v359 = vcombine.high %v355, %v355
    %v360 = vlaneseq
    %v361 = vshrl.u32 %v360, 7
    %v362 = vsub.s32 0, %v361
    %v363 = vrot.slane %v285, %v362
    %v364 = vlaneseq
    %v365 = vshrl.u32 %v364, 7
    %v366 = vsub.s32 0, %v365
    %v367 = vrot.slane %v299, %v366
    %v368 = vlaneseq
    %v369 = vshrl.u32 %v368, 7
    %v370 = vsub.s32 0, %v369
    %v371 = vrot.slane %v307, %v370
    %v372 = vlaneseq
    %v373 = vshrl.u32 %v372, 7
    %v374 = vsub.s32 0, %v373
    %v375 = vrot.slane %v309, %v374
    %v376 = vlaneseq
    %v377 = vshrl.u32 %v376, 7
    %v378 = vsub.s32 0, %v377
    %v379 = vrot.slane %v292, %v378
    %v380 = vlaneseq
    %v381 = vshrl.u32 %v380, 7
    %v382 = vsub.s32 0, %v381
    %v383 = vrot.slane %v306, %v382
    %v384 = vlaneseq
    %v385 = vshrl.u32 %v384, 7
    %v386 = vsub.s32 0, %v385
    %v387 = vrot.slane %v308, %v386
    %v388 = vlaneseq
    %v389 = vshrl.u32 %v388, 7
    %v390 = vsub.s32 0, %v389
    %v391 = vrot.slane %v310, %v390
    %v392 = vlaneseq
    %v393 = vshrl.u32 %v392, 7
    %v394 = vsub.s32 0, %v393
    %v395 = vrot.slane %v334, %v394
    %v396 = vlaneseq
    %v397 = vshrl.u32 %v396, 7
    %v398 = vsub.s32 0, %v397
    %v399 = vrot.slane %v348, %v398
    %v400 = vlaneseq
    %v401 = vshrl.u32 %v400, 7
    %v402 = vsub.s32 0, %v401
    %v403 = vrot.slane %v356, %v402
    %v404 = vlaneseq
    %v405 = vshrl.u32 %v404, 7
    %v406 = vsub.s32 0, %v405
    %v407 = vrot.slane %v358, %v406
    %v408 = vlaneseq
    %v409 = vshrl.u32 %v408, 7
    %v410 = vsub.s32 0, %v409
    %v411 = vrot.slane %v341, %v410
    %v412 = vlaneseq
    %v413 = vshrl.u32 %v412, 7
    %v414 = vsub.s32 0, %v413
    %v415 = vrot.slane %v355, %v414
    %v416 = vlaneseq
    %v417 = vshrl.u32 %v416, 7
    %v418 = vsub.s32 0, %v417
    %v419 = vrot.slane %v357, %v418
    %v420 = vlaneseq
    %v421 = vshrl.u32 %v420, 7
    %v422 = vsub.s32 0, %v421
    %v423 = vrot.slane %v359, %v422
    %v440 = vmul.f32 %v242, %v363
    %v441 = vmul.f32 %v243, %v367
    %v442 = vmul.f32 %v244, %v371
    %v443 = vmul.f32 %v245, %v375
    %v444 = vmul.f32 %v246, %v379
    %v445 = vmul.f32 %v247, %v383
    %v446 = vmul.f32 %v248, %v387
    %v447 = vmul.f32 %v249, %v391
    %v448 = vmul.f32 %v250, %v395
    %v449 = vmul.f32 %v251, %v399
    %v450 = vmul.f32 %v252, %v403
    %v451 = vmul.f32 %v253, %v407
    %v452 = vmul.f32 %v254, %v411
    %v453 = vmul.f32 %v255, %v415
    %v454 = vmul.f32 %v256, %v419
    %v455 = vmul.f32 %v257, %v423
    %456 = vadd.xlane.f32.xlu0 %v440
    %v457 = vpop.xlane.xlu0 %456
    %458 = vadd.xlane.f32.xlu0 %v441
    %v459 = vpop.xlane.xlu0 %458
    %460 = vadd.xlane.f32.xlu0 %v442
    %v461 = vpop.xlane.xlu0 %460
    %462 = vadd.xlane.f32.xlu0 %v443
    %v463 = vpop.xlane.xlu0 %462
    %464 = vadd.xlane.f32.xlu0 %v444
    %v465 = vpop.xlane.xlu0 %464
    %466 = vadd.xlane.f32.xlu0 %v445
    %v467 = vpop.xlane.xlu0 %466
    %468 = vadd.xlane.f32.xlu0 %v446
    %v469 = vpop.xlane.xlu0 %468
    %470 = vadd.xlane.f32.xlu0 %v447
    %v471 = vpop.xlane.xlu0 %470
    %472 = vadd.xlane.f32.xlu0 %v448
    %v473 = vpop.xlane.xlu0 %472
    %474 = vadd.xlane.f32.xlu0 %v449
    %v475 = vpop.xlane.xlu0 %474
    %476 = vadd.xlane.f32.xlu0 %v450
    %v477 = vpop.xlane.xlu0 %476
    %478 = vadd.xlane.f32.xlu0 %v451
    %v479 = vpop.xlane.xlu0 %478
    %480 = vadd.xlane.f32.xlu0 %v452
    %v481 = vpop.xlane.xlu0 %480
    %482 = vadd.xlane.f32.xlu0 %v453
    %v483 = vpop.xlane.xlu0 %482
    %484 = vadd.xlane.f32.xlu0 %v454
    %v485 = vpop.xlane.xlu0 %484
    %486 = vadd.xlane.f32.xlu0 %v455
    %v487 = vpop.xlane.xlu0 %486
    %v488 = vmul.f32 %v457, 0.17677669
    %v489 = vmul.f32 %v459, 0.17677669
    %v490 = vmul.f32 %v461, 0.17677669
    %v491 = vmul.f32 %v463, 0.17677669
    %v492 = vmul.f32 %v465, 0.17677669
    %v493 = vmul.f32 %v467, 0.17677669
    %v494 = vmul.f32 %v469, 0.17677669
    %v495 = vmul.f32 %v471, 0.17677669
    %v496 = vmul.f32 %v473, 0.17677669
    %v497 = vmul.f32 %v475, 0.17677669
    %v498 = vmul.f32 %v477, 0.17677669
    %v499 = vmul.f32 %v479, 0.17677669
    %v500 = vmul.f32 %v481, 0.17677669
    %v501 = vmul.f32 %v483, 0.17677669
    %v502 = vmul.f32 %v485, 0.17677669
    %v503 = vmul.f32 %v487, 0.17677669
    %v504 = vld [vmem:[%s1] sm:$0xff]
    %v505 = vld [vmem:[%s1 + $0x8] sm:$0xff]
    %v508 = vlaneseq
    %v509 = vshrl.u32 %v508, 7
    %v510 = vsub.s32 0, %v509
    %v511 = vrot.slane %v504, %v510
    %513 = vbcast.lane.b32.xlu0 %v511, 256
    %v514 = vpop.permute.xlu0 %513
    %v515 = vlaneseq
    %v516 = vshrl.u32 %v515, 7
    %v517 = vsub.s32 1, %v516
    %v518 = vrot.slane %v504, %v517
    %520 = vbcast.lane.b32.xlu0 %v518, 256
    %v521 = vpop.permute.xlu0 %520
    %v522 = vlaneseq
    %v523 = vshrl.u32 %v522, 7
    %v524 = vsub.s32 2, %v523
    %v525 = vrot.slane %v504, %v524
    %527 = vbcast.lane.b32.xlu0 %v525, 256
    %v528 = vpop.permute.xlu0 %527
    %v529 = vlaneseq
    %v530 = vshrl.u32 %v529, 7
    %v531 = vsub.s32 3, %v530
    %v532 = vrot.slane %v504, %v531
    %534 = vbcast.lane.b32.xlu0 %v532, 256
    %v535 = vpop.permute.xlu0 %534
    %v536 = vlaneseq
    %v537 = vshrl.u32 %v536, 7
    %v538 = vsub.s32 4, %v537
    %v539 = vrot.slane %v504, %v538
    %541 = vbcast.lane.b32.xlu0 %v539, 256
    %v542 = vpop.permute.xlu0 %541
    %v543 = vlaneseq
    %v544 = vshrl.u32 %v543, 7
    %v545 = vsub.s32 5, %v544
    %v546 = vrot.slane %v504, %v545
    %548 = vbcast.lane.b32.xlu0 %v546, 256
    %v549 = vpop.permute.xlu0 %548
    %v550 = vlaneseq
    %v551 = vshrl.u32 %v550, 7
    %v552 = vsub.s32 6, %v551
    %v553 = vrot.slane %v504, %v552
    %555 = vbcast.lane.b32.xlu0 %v553, 256
    %v556 = vpop.permute.xlu0 %555
    %v557 = vlaneseq
    %v558 = vshrl.u32 %v557, 7
    %v559 = vsub.s32 7, %v558
    %v560 = vrot.slane %v504, %v559
    %562 = vbcast.lane.b32.xlu0 %v560, 256
    %v563 = vpop.permute.xlu0 %562
    %v564 = vlaneseq
    %v565 = vshrl.u32 %v564, 7
    %v566 = vsub.s32 0, %v565
    %v567 = vrot.slane %v505, %v566
    %569 = vbcast.lane.b32.xlu0 %v567, 256
    %v570 = vpop.permute.xlu0 %569
    %v571 = vlaneseq
    %v572 = vshrl.u32 %v571, 7
    %v573 = vsub.s32 1, %v572
    %v574 = vrot.slane %v505, %v573
    %576 = vbcast.lane.b32.xlu0 %v574, 256
    %v577 = vpop.permute.xlu0 %576
    %v578 = vlaneseq
    %v579 = vshrl.u32 %v578, 7
    %v580 = vsub.s32 2, %v579
    %v581 = vrot.slane %v505, %v580
    %583 = vbcast.lane.b32.xlu0 %v581, 256
    %v584 = vpop.permute.xlu0 %583
    %v585 = vlaneseq
    %v586 = vshrl.u32 %v585, 7
    %v587 = vsub.s32 3, %v586
    %v588 = vrot.slane %v505, %v587
    %590 = vbcast.lane.b32.xlu0 %v588, 256
    %v591 = vpop.permute.xlu0 %590
    %v592 = vlaneseq
    %v593 = vshrl.u32 %v592, 7
    %v594 = vsub.s32 4, %v593
    %v595 = vrot.slane %v505, %v594
    %597 = vbcast.lane.b32.xlu0 %v595, 256
    %v598 = vpop.permute.xlu0 %597
    %v599 = vlaneseq
    %v600 = vshrl.u32 %v599, 7
    %v601 = vsub.s32 5, %v600
    %v602 = vrot.slane %v505, %v601
    %604 = vbcast.lane.b32.xlu0 %v602, 256
    %v605 = vpop.permute.xlu0 %604
    %v606 = vlaneseq
    %v607 = vshrl.u32 %v606, 7
    %v608 = vsub.s32 6, %v607
    %v609 = vrot.slane %v505, %v608
    %611 = vbcast.lane.b32.xlu0 %v609, 256
    %v612 = vpop.permute.xlu0 %611
    %v613 = vlaneseq
    %v614 = vshrl.u32 %v613, 7
    %v615 = vsub.s32 7, %v614
    %v616 = vrot.slane %v505, %v615
    %618 = vbcast.lane.b32.xlu0 %v616, 256
    %v619 = vpop.permute.xlu0 %618
    %v636 = vadd.f32 %v488, %v514
    %v637 = vadd.f32 %v489, %v521
    %v638 = vadd.f32 %v490, %v528
    %v639 = vadd.f32 %v491, %v535
    %v640 = vadd.f32 %v492, %v542
    %v641 = vadd.f32 %v493, %v549
    %v642 = vadd.f32 %v494, %v556
    %v643 = vadd.f32 %v495, %v563
    %v644 = vadd.f32 %v496, %v570
    %v645 = vadd.f32 %v497, %v577
    %v646 = vadd.f32 %v498, %v584
    %v647 = vadd.f32 %v499, %v591
    %v648 = vadd.f32 %v500, %v598
    %v649 = vadd.f32 %v501, %v605
    %v650 = vadd.f32 %v502, %v612
    %v651 = vadd.f32 %v503, %v619
    %668 = vset.pattern.permute.xlu0 0
    %669 = vperm.xlu0 %668, %v636
    %v670 = vpop.permute.xlu0 %669
    %671 = vset.pattern.permute.xlu0 0
    %672 = vperm.xlu0 %671, %v637
    %v673 = vpop.permute.xlu0 %672
    %674 = vset.pattern.permute.xlu0 0
    %675 = vperm.xlu0 %674, %v638
    %v676 = vpop.permute.xlu0 %675
    %677 = vset.pattern.permute.xlu0 0
    %678 = vperm.xlu0 %677, %v639
    %v679 = vpop.permute.xlu0 %678
    %680 = vset.pattern.permute.xlu0 0
    %681 = vperm.xlu0 %680, %v640
    %v682 = vpop.permute.xlu0 %681
    %683 = vset.pattern.permute.xlu0 0
    %684 = vperm.xlu0 %683, %v641
    %v685 = vpop.permute.xlu0 %684
    %686 = vset.pattern.permute.xlu0 0
    %687 = vperm.xlu0 %686, %v642
    %v688 = vpop.permute.xlu0 %687
    %689 = vset.pattern.permute.xlu0 0
    %690 = vperm.xlu0 %689, %v643
    %v691 = vpop.permute.xlu0 %690
    %692 = vset.pattern.permute.xlu0 0
    %693 = vperm.xlu0 %692, %v644
    %v694 = vpop.permute.xlu0 %693
    %695 = vset.pattern.permute.xlu0 0
    %696 = vperm.xlu0 %695, %v645
    %v697 = vpop.permute.xlu0 %696
    %698 = vset.pattern.permute.xlu0 0
    %699 = vperm.xlu0 %698, %v646
    %v700 = vpop.permute.xlu0 %699
    %701 = vset.pattern.permute.xlu0 0
    %702 = vperm.xlu0 %701, %v647
    %v703 = vpop.permute.xlu0 %702
    %704 = vset.pattern.permute.xlu0 0
    %705 = vperm.xlu0 %704, %v648
    %v706 = vpop.permute.xlu0 %705
    %707 = vset.pattern.permute.xlu0 0
    %708 = vperm.xlu0 %707, %v649
    %v709 = vpop.permute.xlu0 %708
    %710 = vset.pattern.permute.xlu0 0
    %711 = vperm.xlu0 %710, %v650
    %v712 = vpop.permute.xlu0 %711
    %713 = vset.pattern.permute.xlu0 0
    %714 = vperm.xlu0 %713, %v651
    %v715 = vpop.permute.xlu0 %714
    %v716 = vlaneseq
    %v717 = vand.u32 %v716, 127
    %v718 = vlaneseq
    %v719 = vshrl.u32 %v718, 7
    %v720 = vsub.s32 %v717, %v719
    %v721 = vrot.slane %v670, %v720
    %v722 = vlaneseq
    %v723 = vshrl.u32 %v722, 7
    %v724 = vsub.s32 %v717, %v723
    %v725 = vrot.slane %v673, %v724
    %v726 = vlaneseq
    %v727 = vshrl.u32 %v726, 7
    %v728 = vsub.s32 %v717, %v727
    %v729 = vrot.slane %v676, %v728
    %v730 = vlaneseq
    %v731 = vshrl.u32 %v730, 7
    %v732 = vsub.s32 %v717, %v731
    %v733 = vrot.slane %v679, %v732
    %v734 = vlaneseq
    %v735 = vshrl.u32 %v734, 7
    %v736 = vsub.s32 %v717, %v735
    %v737 = vrot.slane %v682, %v736
    %v738 = vlaneseq
    %v739 = vshrl.u32 %v738, 7
    %v740 = vsub.s32 %v717, %v739
    %v741 = vrot.slane %v685, %v740
    %v742 = vlaneseq
    %v743 = vshrl.u32 %v742, 7
    %v744 = vsub.s32 %v717, %v743
    %v745 = vrot.slane %v688, %v744
    %v746 = vlaneseq
    %v747 = vshrl.u32 %v746, 7
    %v748 = vsub.s32 %v717, %v747
    %v749 = vrot.slane %v691, %v748
    %v750 = vlaneseq
    %v751 = vshrl.u32 %v750, 7
    %v752 = vsub.s32 %v717, %v751
    %v753 = vrot.slane %v694, %v752
    %v754 = vlaneseq
    %v755 = vshrl.u32 %v754, 7
    %v756 = vsub.s32 %v717, %v755
    %v757 = vrot.slane %v697, %v756
    %v758 = vlaneseq
    %v759 = vshrl.u32 %v758, 7
    %v760 = vsub.s32 %v717, %v759
    %v761 = vrot.slane %v700, %v760
    %v762 = vlaneseq
    %v763 = vshrl.u32 %v762, 7
    %v764 = vsub.s32 %v717, %v763
    %v765 = vrot.slane %v703, %v764
    %v766 = vlaneseq
    %v767 = vshrl.u32 %v766, 7
    %v768 = vsub.s32 %v717, %v767
    %v769 = vrot.slane %v706, %v768
    %v770 = vlaneseq
    %v771 = vshrl.u32 %v770, 7
    %v772 = vsub.s32 %v717, %v771
    %v773 = vrot.slane %v709, %v772
    %v774 = vlaneseq
    %v775 = vshrl.u32 %v774, 7
    %v776 = vsub.s32 %v717, %v775
    %v777 = vrot.slane %v712, %v776
    %v778 = vlaneseq
    %v779 = vshrl.u32 %v778, 7
    %v780 = vsub.s32 %v717, %v779
    %v781 = vrot.slane %v715, %v780
    %vm782 = vcmask 1041409
    %v783 = vsel %vm782, %v725, %v721
    %vm784 = vcmask 1042434
    %v785 = vsel %vm784, %v729, %v783
    %vm786 = vcmask 1043459
    %v787 = vsel %vm786, %v733, %v785
    %vm788 = vcmask 1044484
    %v789 = vsel %vm788, %v737, %v787
    %vm790 = vcmask 1045509
    %v791 = vsel %vm790, %v741, %v789
    %vm792 = vcmask 1046534
    %v793 = vsel %vm792, %v745, %v791
    %vm794 = vcmask 1047559
    %v795 = vsel %vm794, %v749, %v793
    %v796 = vsel %vm782, %v757, %v753
    %v797 = vsel %vm784, %v761, %v796
    %v798 = vsel %vm786, %v765, %v797
    %v799 = vsel %vm788, %v769, %v798
    %v800 = vsel %vm790, %v773, %v799
    %v801 = vsel %vm792, %v777, %v800
    %v802 = vsel %vm794, %v781, %v801
    %vm805 = vcmask 64512
    %v806 = vsel %vm805, %v795, -inf
    %807 = vmax.xlane.f32.xlu0 %v806
    %v808 = vpop.xlane.xlu0 %807
    %v809 = vsel %vm805, %v802, -inf
    %810 = vmax.xlane.f32.xlu0 %v809
    %v811 = vpop.xlane.xlu0 %810
    %v814 = vlaneseq
    %v815 = vshrl.u32 %v814, 7
    %v816 = vsub.s32 0, %v815
    %v817 = vrot.slane %v808, %v816
    %v818 = vlaneseq
    %v819 = vshrl.u32 %v818, 7
    %v820 = vsub.s32 1, %v819
    %v821 = vrot.slane %v808, %v820
    %v822 = vlaneseq
    %v823 = vshrl.u32 %v822, 7
    %v824 = vsub.s32 2, %v823
    %v825 = vrot.slane %v808, %v824
    %v826 = vlaneseq
    %v827 = vshrl.u32 %v826, 7
    %v828 = vsub.s32 3, %v827
    %v829 = vrot.slane %v808, %v828
    %v830 = vlaneseq
    %v831 = vshrl.u32 %v830, 7
    %v832 = vsub.s32 4, %v831
    %v833 = vrot.slane %v808, %v832
    %v834 = vlaneseq
    %v835 = vshrl.u32 %v834, 7
    %v836 = vsub.s32 5, %v835
    %v837 = vrot.slane %v808, %v836
    %v838 = vlaneseq
    %v839 = vshrl.u32 %v838, 7
    %v840 = vsub.s32 6, %v839
    %v841 = vrot.slane %v808, %v840
    %v842 = vlaneseq
    %v843 = vshrl.u32 %v842, 7
    %v844 = vsub.s32 7, %v843
    %v845 = vrot.slane %v808, %v844
    %v846 = vlaneseq
    %v847 = vshrl.u32 %v846, 7
    %v848 = vsub.s32 0, %v847
    %v849 = vrot.slane %v811, %v848
    %v850 = vlaneseq
    %v851 = vshrl.u32 %v850, 7
    %v852 = vsub.s32 1, %v851
    %v853 = vrot.slane %v811, %v852
    %v854 = vlaneseq
    %v855 = vshrl.u32 %v854, 7
    %v856 = vsub.s32 2, %v855
    %v857 = vrot.slane %v811, %v856
    %v858 = vlaneseq
    %v859 = vshrl.u32 %v858, 7
    %v860 = vsub.s32 3, %v859
    %v861 = vrot.slane %v811, %v860
    %v862 = vlaneseq
    %v863 = vshrl.u32 %v862, 7
    %v864 = vsub.s32 4, %v863
    %v865 = vrot.slane %v811, %v864
    %v866 = vlaneseq
    %v867 = vshrl.u32 %v866, 7
    %v868 = vsub.s32 5, %v867
    %v869 = vrot.slane %v811, %v868
    %v870 = vlaneseq
    %v871 = vshrl.u32 %v870, 7
    %v872 = vsub.s32 6, %v871
    %v873 = vrot.slane %v811, %v872
    %v874 = vlaneseq
    %v875 = vshrl.u32 %v874, 7
    %v876 = vsub.s32 7, %v875
    %v877 = vrot.slane %v811, %v876
    %v894 = vsub.f32 %v636, %v817
    %v895 = vsub.f32 %v637, %v821
    %v896 = vsub.f32 %v638, %v825
    %v897 = vsub.f32 %v639, %v829
    %v898 = vsub.f32 %v640, %v833
    %v899 = vsub.f32 %v641, %v837
    %v900 = vsub.f32 %v642, %v841
    %v901 = vsub.f32 %v643, %v845
    %v902 = vsub.f32 %v644, %v849
    %v903 = vsub.f32 %v645, %v853
    %v904 = vsub.f32 %v646, %v857
    %v905 = vsub.f32 %v647, %v861
    %v906 = vsub.f32 %v648, %v865
    %v907 = vsub.f32 %v649, %v869
    %v908 = vsub.f32 %v650, %v873
    %v909 = vsub.f32 %v651, %v877
    %v910 = vmul.f32 %v894, 1.442695
    %v911 = vpow.pop %v910
    %v912 = vmul.f32 %v895, 1.442695
    %v913 = vpow.pop %v912
    %v914 = vmul.f32 %v896, 1.442695
    %v915 = vpow.pop %v914
    %v916 = vmul.f32 %v897, 1.442695
    %v917 = vpow.pop %v916
    %v918 = vmul.f32 %v898, 1.442695
    %v919 = vpow.pop %v918
    %v920 = vmul.f32 %v899, 1.442695
    %v921 = vpow.pop %v920
    %v922 = vmul.f32 %v900, 1.442695
    %v923 = vpow.pop %v922
    %v924 = vmul.f32 %v901, 1.442695
    %v925 = vpow.pop %v924
    %v926 = vmul.f32 %v902, 1.442695
    %v927 = vpow.pop %v926
    %v928 = vmul.f32 %v903, 1.442695
    %v929 = vpow.pop %v928
    %v930 = vmul.f32 %v904, 1.442695
    %v931 = vpow.pop %v930
    %v932 = vmul.f32 %v905, 1.442695
    %v933 = vpow.pop %v932
    %v934 = vmul.f32 %v906, 1.442695
    %v935 = vpow.pop %v934
    %v936 = vmul.f32 %v907, 1.442695
    %v937 = vpow.pop %v936
    %v938 = vmul.f32 %v908, 1.442695
    %v939 = vpow.pop %v938
    %v940 = vmul.f32 %v909, 1.442695
    %v941 = vpow.pop %v940
    %958 = vset.pattern.permute.xlu0 0
    %959 = vperm.xlu0 %958, %v911
    %v960 = vpop.permute.xlu0 %959
    %961 = vset.pattern.permute.xlu0 0
    %962 = vperm.xlu0 %961, %v913
    %v963 = vpop.permute.xlu0 %962
    %964 = vset.pattern.permute.xlu0 0
    %965 = vperm.xlu0 %964, %v915
    %v966 = vpop.permute.xlu0 %965
    %967 = vset.pattern.permute.xlu0 0
    %968 = vperm.xlu0 %967, %v917
    %v969 = vpop.permute.xlu0 %968
    %970 = vset.pattern.permute.xlu0 0
    %971 = vperm.xlu0 %970, %v919
    %v972 = vpop.permute.xlu0 %971
    %973 = vset.pattern.permute.xlu0 0
    %974 = vperm.xlu0 %973, %v921
    %v975 = vpop.permute.xlu0 %974
    %976 = vset.pattern.permute.xlu0 0
    %977 = vperm.xlu0 %976, %v923
    %v978 = vpop.permute.xlu0 %977
    %979 = vset.pattern.permute.xlu0 0
    %980 = vperm.xlu0 %979, %v925
    %v981 = vpop.permute.xlu0 %980
    %982 = vset.pattern.permute.xlu0 0
    %983 = vperm.xlu0 %982, %v927
    %v984 = vpop.permute.xlu0 %983
    %985 = vset.pattern.permute.xlu0 0
    %986 = vperm.xlu0 %985, %v929
    %v987 = vpop.permute.xlu0 %986
    %988 = vset.pattern.permute.xlu0 0
    %989 = vperm.xlu0 %988, %v931
    %v990 = vpop.permute.xlu0 %989
    %991 = vset.pattern.permute.xlu0 0
    %992 = vperm.xlu0 %991, %v933
    %v993 = vpop.permute.xlu0 %992
    %994 = vset.pattern.permute.xlu0 0
    %995 = vperm.xlu0 %994, %v935
    %v996 = vpop.permute.xlu0 %995
    %997 = vset.pattern.permute.xlu0 0
    %998 = vperm.xlu0 %997, %v937
    %v999 = vpop.permute.xlu0 %998
    %1000 = vset.pattern.permute.xlu0 0
    %1001 = vperm.xlu0 %1000, %v939
    %v1002 = vpop.permute.xlu0 %1001
    %1003 = vset.pattern.permute.xlu0 0
    %1004 = vperm.xlu0 %1003, %v941
    %v1005 = vpop.permute.xlu0 %1004
    %v1006 = vlaneseq
    %v1007 = vshrl.u32 %v1006, 7
    %v1008 = vsub.s32 %v717, %v1007
    %v1009 = vrot.slane %v960, %v1008
    %v1010 = vlaneseq
    %v1011 = vshrl.u32 %v1010, 7
    %v1012 = vsub.s32 %v717, %v1011
    %v1013 = vrot.slane %v963, %v1012
    %v1014 = vlaneseq
    %v1015 = vshrl.u32 %v1014, 7
    %v1016 = vsub.s32 %v717, %v1015
    %v1017 = vrot.slane %v966, %v1016
    %v1018 = vlaneseq
    %v1019 = vshrl.u32 %v1018, 7
    %v1020 = vsub.s32 %v717, %v1019
    %v1021 = vrot.slane %v969, %v1020
    %v1022 = vlaneseq
    %v1023 = vshrl.u32 %v1022, 7
    %v1024 = vsub.s32 %v717, %v1023
    %v1025 = vrot.slane %v972, %v1024
    %v1026 = vlaneseq
    %v1027 = vshrl.u32 %v1026, 7
    %v1028 = vsub.s32 %v717, %v1027
    %v1029 = vrot.slane %v975, %v1028
    %v1030 = vlaneseq
    %v1031 = vshrl.u32 %v1030, 7
    %v1032 = vsub.s32 %v717, %v1031
    %v1033 = vrot.slane %v978, %v1032
    %v1034 = vlaneseq
    %v1035 = vshrl.u32 %v1034, 7
    %v1036 = vsub.s32 %v717, %v1035
    %v1037 = vrot.slane %v981, %v1036
    %v1038 = vlaneseq
    %v1039 = vshrl.u32 %v1038, 7
    %v1040 = vsub.s32 %v717, %v1039
    %v1041 = vrot.slane %v984, %v1040
    %v1042 = vlaneseq
    %v1043 = vshrl.u32 %v1042, 7
    %v1044 = vsub.s32 %v717, %v1043
    %v1045 = vrot.slane %v987, %v1044
    %v1046 = vlaneseq
    %v1047 = vshrl.u32 %v1046, 7
    %v1048 = vsub.s32 %v717, %v1047
    %v1049 = vrot.slane %v990, %v1048
    %v1050 = vlaneseq
    %v1051 = vshrl.u32 %v1050, 7
    %v1052 = vsub.s32 %v717, %v1051
    %v1053 = vrot.slane %v993, %v1052
    %v1054 = vlaneseq
    %v1055 = vshrl.u32 %v1054, 7
    %v1056 = vsub.s32 %v717, %v1055
    %v1057 = vrot.slane %v996, %v1056
    %v1058 = vlaneseq
    %v1059 = vshrl.u32 %v1058, 7
    %v1060 = vsub.s32 %v717, %v1059
    %v1061 = vrot.slane %v999, %v1060
    %v1062 = vlaneseq
    %v1063 = vshrl.u32 %v1062, 7
    %v1064 = vsub.s32 %v717, %v1063
    %v1065 = vrot.slane %v1002, %v1064
    %v1066 = vlaneseq
    %v1067 = vshrl.u32 %v1066, 7
    %v1068 = vsub.s32 %v717, %v1067
    %v1069 = vrot.slane %v1005, %v1068
    %v1070 = vsel %vm782, %v1013, %v1009
    %v1071 = vsel %vm784, %v1017, %v1070
    %v1072 = vsel %vm786, %v1021, %v1071
    %v1073 = vsel %vm788, %v1025, %v1072
    %v1074 = vsel %vm790, %v1029, %v1073
    %v1075 = vsel %vm792, %v1033, %v1074
    %v1076 = vsel %vm794, %v1037, %v1075
    %v1077 = vsel %vm782, %v1045, %v1041
    %v1078 = vsel %vm784, %v1049, %v1077
    %v1079 = vsel %vm786, %v1053, %v1078
    %v1080 = vsel %vm788, %v1057, %v1079
    %v1081 = vsel %vm790, %v1061, %v1080
    %v1082 = vsel %vm792, %v1065, %v1081
    %v1083 = vsel %vm794, %v1069, %v1082
    %v1086 = vsel %vm805, %v1076, 0.0
    %1087 = vadd.xlane.f32.xlu0 %v1086
    %v1088 = vpop.xlane.xlu0 %1087
    %v1089 = vsel %vm805, %v1083, 0.0
    %1090 = vadd.xlane.f32.xlu0 %v1089
    %v1091 = vpop.xlane.xlu0 %1090
    %v1092 = vrcp.pop %v1088
    %v1093 = vrcp.pop %v1091
    %v1096 = vlaneseq
    %v1097 = vshrl.u32 %v1096, 7
    %v1098 = vsub.s32 0, %v1097
    %v1099 = vrot.slane %v1092, %v1098
    %v1100 = vlaneseq
    %v1101 = vshrl.u32 %v1100, 7
    %v1102 = vsub.s32 1, %v1101
    %v1103 = vrot.slane %v1092, %v1102
    %v1104 = vlaneseq
    %v1105 = vshrl.u32 %v1104, 7
    %v1106 = vsub.s32 2, %v1105
    %v1107 = vrot.slane %v1092, %v1106
    %v1108 = vlaneseq
    %v1109 = vshrl.u32 %v1108, 7
    %v1110 = vsub.s32 3, %v1109
    %v1111 = vrot.slane %v1092, %v1110
    %v1112 = vlaneseq
    %v1113 = vshrl.u32 %v1112, 7
    %v1114 = vsub.s32 4, %v1113
    %v1115 = vrot.slane %v1092, %v1114
    %v1116 = vlaneseq
    %v1117 = vshrl.u32 %v1116, 7
    %v1118 = vsub.s32 5, %v1117
    %v1119 = vrot.slane %v1092, %v1118
    %v1120 = vlaneseq
    %v1121 = vshrl.u32 %v1120, 7
    %v1122 = vsub.s32 6, %v1121
    %v1123 = vrot.slane %v1092, %v1122
    %v1124 = vlaneseq
    %v1125 = vshrl.u32 %v1124, 7
    %v1126 = vsub.s32 7, %v1125
    %v1127 = vrot.slane %v1092, %v1126
    %v1128 = vlaneseq
    %v1129 = vshrl.u32 %v1128, 7
    %v1130 = vsub.s32 0, %v1129
    %v1131 = vrot.slane %v1093, %v1130
    %v1132 = vlaneseq
    %v1133 = vshrl.u32 %v1132, 7
    %v1134 = vsub.s32 1, %v1133
    %v1135 = vrot.slane %v1093, %v1134
    %v1136 = vlaneseq
    %v1137 = vshrl.u32 %v1136, 7
    %v1138 = vsub.s32 2, %v1137
    %v1139 = vrot.slane %v1093, %v1138
    %v1140 = vlaneseq
    %v1141 = vshrl.u32 %v1140, 7
    %v1142 = vsub.s32 3, %v1141
    %v1143 = vrot.slane %v1093, %v1142
    %v1144 = vlaneseq
    %v1145 = vshrl.u32 %v1144, 7
    %v1146 = vsub.s32 4, %v1145
    %v1147 = vrot.slane %v1093, %v1146
    %v1148 = vlaneseq
    %v1149 = vshrl.u32 %v1148, 7
    %v1150 = vsub.s32 5, %v1149
    %v1151 = vrot.slane %v1093, %v1150
    %v1152 = vlaneseq
    %v1153 = vshrl.u32 %v1152, 7
    %v1154 = vsub.s32 6, %v1153
    %v1155 = vrot.slane %v1093, %v1154
    %v1156 = vlaneseq
    %v1157 = vshrl.u32 %v1156, 7
    %v1158 = vsub.s32 7, %v1157
    %v1159 = vrot.slane %v1093, %v1158
    %v1176 = vmul.f32 %v911, %v1099
    %v1177 = vmul.f32 %v913, %v1103
    %v1178 = vmul.f32 %v915, %v1107
    %v1179 = vmul.f32 %v917, %v1111
    %v1180 = vmul.f32 %v919, %v1115
    %v1181 = vmul.f32 %v921, %v1119
    %v1182 = vmul.f32 %v923, %v1123
    %v1183 = vmul.f32 %v925, %v1127
    %v1184 = vmul.f32 %v927, %v1131
    %v1185 = vmul.f32 %v929, %v1135
    %v1186 = vmul.f32 %v931, %v1139
    %v1187 = vmul.f32 %v933, %v1143
    %v1188 = vmul.f32 %v935, %v1147
    %v1189 = vmul.f32 %v937, %v1151
    %v1190 = vmul.f32 %v939, %v1155
    %v1191 = vmul.f32 %v941, %v1159
    %1193 = vset.pattern.permute.xlu0 0
    %1194 = vperm.xlu0 %1193, %v1176
    %v1195 = vpop.permute.xlu0 %1194
    %1198 = vset.pattern.permute.xlu0 0
    %1199 = vperm.xlu0 %1198, %v1177
    %v1200 = vpop.permute.xlu0 %1199
    %1203 = vset.pattern.permute.xlu0 0
    %1204 = vperm.xlu0 %1203, %v1178
    %v1205 = vpop.permute.xlu0 %1204
    %1208 = vset.pattern.permute.xlu0 0
    %1209 = vperm.xlu0 %1208, %v1179
    %v1210 = vpop.permute.xlu0 %1209
    %1213 = vset.pattern.permute.xlu0 0
    %1214 = vperm.xlu0 %1213, %v1180
    %v1215 = vpop.permute.xlu0 %1214
    %1218 = vset.pattern.permute.xlu0 0
    %1219 = vperm.xlu0 %1218, %v1181
    %v1220 = vpop.permute.xlu0 %1219
    %1223 = vset.pattern.permute.xlu0 0
    %1224 = vperm.xlu0 %1223, %v1182
    %v1225 = vpop.permute.xlu0 %1224
    %1228 = vset.pattern.permute.xlu0 0
    %1229 = vperm.xlu0 %1228, %v1183
    %v1230 = vpop.permute.xlu0 %1229
    %1233 = vset.pattern.permute.xlu0 0
    %1234 = vperm.xlu0 %1233, %v1184
    %v1235 = vpop.permute.xlu0 %1234
    %1238 = vset.pattern.permute.xlu0 0
    %1239 = vperm.xlu0 %1238, %v1185
    %v1240 = vpop.permute.xlu0 %1239
    %1243 = vset.pattern.permute.xlu0 0
    %1244 = vperm.xlu0 %1243, %v1186
    %v1245 = vpop.permute.xlu0 %1244
    %1248 = vset.pattern.permute.xlu0 0
    %1249 = vperm.xlu0 %1248, %v1187
    %v1250 = vpop.permute.xlu0 %1249
    %1253 = vset.pattern.permute.xlu0 0
    %1254 = vperm.xlu0 %1253, %v1188
    %v1255 = vpop.permute.xlu0 %1254
    %1258 = vset.pattern.permute.xlu0 0
    %1259 = vperm.xlu0 %1258, %v1189
    %v1260 = vpop.permute.xlu0 %1259
    %1263 = vset.pattern.permute.xlu0 0
    %1264 = vperm.xlu0 %1263, %v1190
    %v1265 = vpop.permute.xlu0 %1264
    %1268 = vset.pattern.permute.xlu0 0
    %1269 = vperm.xlu0 %1268, %v1191
    %v1270 = vpop.permute.xlu0 %1269
    %v1272 = vmul.f32 %v1195, %v50
    %v1273 = vmul.f32 %v1200, %v51
    %v1274 = vmul.f32 %v1205, %v52
    %v1275 = vmul.f32 %v1210, %v53
    %v1276 = vmul.f32 %v1215, %v54
    %v1277 = vmul.f32 %v1220, %v55
    %v1278 = vmul.f32 %v1225, %v56
    %v1279 = vmul.f32 %v1230, %v57
    %v1280 = vmul.f32 %v1235, %v58
    %v1281 = vmul.f32 %v1240, %v59
    %v1282 = vmul.f32 %v1245, %v60
    %v1283 = vmul.f32 %v1250, %v61
    %v1284 = vmul.f32 %v1255, %v62
    %v1285 = vmul.f32 %v1260, %v63
    %v1286 = vmul.f32 %v1265, %v64
    %v1287 = vmul.f32 %v1270, %v65
    %v1288 = vrot.slane %v1272, 4
    %v1289 = vadd.f32 %v1272, %v1288
    %v1290 = vrot.slane %v1289, 2
    %v1291 = vadd.f32 %v1289, %v1290
    %v1292 = vrot.slane %v1291, 1
    %v1293 = vadd.f32 %v1291, %v1292
    %v1294 = vrot.slane %v1273, 4
    %v1295 = vadd.f32 %v1273, %v1294
    %v1296 = vrot.slane %v1295, 2
    %v1297 = vadd.f32 %v1295, %v1296
    %v1298 = vrot.slane %v1297, 1
    %v1299 = vadd.f32 %v1297, %v1298
    %v1300 = vrot.slane %v1274, 4
    %v1301 = vadd.f32 %v1274, %v1300
    %v1302 = vrot.slane %v1301, 2
    %v1303 = vadd.f32 %v1301, %v1302
    %v1304 = vrot.slane %v1303, 1
    %v1305 = vadd.f32 %v1303, %v1304
    %v1306 = vrot.slane %v1275, 4
    %v1307 = vadd.f32 %v1275, %v1306
    %v1308 = vrot.slane %v1307, 2
    %v1309 = vadd.f32 %v1307, %v1308
    %v1310 = vrot.slane %v1309, 1
    %v1311 = vadd.f32 %v1309, %v1310
    %v1312 = vrot.slane %v1276, 4
    %v1313 = vadd.f32 %v1276, %v1312
    %v1314 = vrot.slane %v1313, 2
    %v1315 = vadd.f32 %v1313, %v1314
    %v1316 = vrot.slane %v1315, 1
    %v1317 = vadd.f32 %v1315, %v1316
    %v1318 = vrot.slane %v1277, 4
    %v1319 = vadd.f32 %v1277, %v1318
    %v1320 = vrot.slane %v1319, 2
    %v1321 = vadd.f32 %v1319, %v1320
    %v1322 = vrot.slane %v1321, 1
    %v1323 = vadd.f32 %v1321, %v1322
    %v1324 = vrot.slane %v1278, 4
    %v1325 = vadd.f32 %v1278, %v1324
    %v1326 = vrot.slane %v1325, 2
    %v1327 = vadd.f32 %v1325, %v1326
    %v1328 = vrot.slane %v1327, 1
    %v1329 = vadd.f32 %v1327, %v1328
    %v1330 = vrot.slane %v1279, 4
    %v1331 = vadd.f32 %v1279, %v1330
    %v1332 = vrot.slane %v1331, 2
    %v1333 = vadd.f32 %v1331, %v1332
    %v1334 = vrot.slane %v1333, 1
    %v1335 = vadd.f32 %v1333, %v1334
    %v1336 = vrot.slane %v1280, 4
    %v1337 = vadd.f32 %v1280, %v1336
    %v1338 = vrot.slane %v1337, 2
    %v1339 = vadd.f32 %v1337, %v1338
    %v1340 = vrot.slane %v1339, 1
    %v1341 = vadd.f32 %v1339, %v1340
    %v1342 = vrot.slane %v1281, 4
    %v1343 = vadd.f32 %v1281, %v1342
    %v1344 = vrot.slane %v1343, 2
    %v1345 = vadd.f32 %v1343, %v1344
    %v1346 = vrot.slane %v1345, 1
    %v1347 = vadd.f32 %v1345, %v1346
    %v1348 = vrot.slane %v1282, 4
    %v1349 = vadd.f32 %v1282, %v1348
    %v1350 = vrot.slane %v1349, 2
    %v1351 = vadd.f32 %v1349, %v1350
    %v1352 = vrot.slane %v1351, 1
    %v1353 = vadd.f32 %v1351, %v1352
    %v1354 = vrot.slane %v1283, 4
    %v1355 = vadd.f32 %v1283, %v1354
    %v1356 = vrot.slane %v1355, 2
    %v1357 = vadd.f32 %v1355, %v1356
    %v1358 = vrot.slane %v1357, 1
    %v1359 = vadd.f32 %v1357, %v1358
    %v1360 = vrot.slane %v1284, 4
    %v1361 = vadd.f32 %v1284, %v1360
    %v1362 = vrot.slane %v1361, 2
    %v1363 = vadd.f32 %v1361, %v1362
    %v1364 = vrot.slane %v1363, 1
    %v1365 = vadd.f32 %v1363, %v1364
    %v1366 = vrot.slane %v1285, 4
    %v1367 = vadd.f32 %v1285, %v1366
    %v1368 = vrot.slane %v1367, 2
    %v1369 = vadd.f32 %v1367, %v1368
    %v1370 = vrot.slane %v1369, 1
    %v1371 = vadd.f32 %v1369, %v1370
    %v1372 = vrot.slane %v1286, 4
    %v1373 = vadd.f32 %v1286, %v1372
    %v1374 = vrot.slane %v1373, 2
    %v1375 = vadd.f32 %v1373, %v1374
    %v1376 = vrot.slane %v1375, 1
    %v1377 = vadd.f32 %v1375, %v1376
    %v1378 = vrot.slane %v1287, 4
    %v1379 = vadd.f32 %v1287, %v1378
    %v1380 = vrot.slane %v1379, 2
    %v1381 = vadd.f32 %v1379, %v1380
    %v1382 = vrot.slane %v1381, 1
    %v1383 = vadd.f32 %v1381, %v1382
    %v1400 = vsel %vm782, %v1299, %v1293
    %v1401 = vsel %vm784, %v1305, %v1400
    %v1402 = vsel %vm786, %v1311, %v1401
    %v1403 = vsel %vm788, %v1317, %v1402
    %v1404 = vsel %vm790, %v1323, %v1403
    %v1405 = vsel %vm792, %v1329, %v1404
    %v1406 = vsel %vm794, %v1335, %v1405
    %v1407 = vsel %vm782, %v1347, %v1341
    %v1408 = vsel %vm784, %v1353, %v1407
    %v1409 = vsel %vm786, %v1359, %v1408
    %v1410 = vsel %vm788, %v1365, %v1409
    %v1411 = vsel %vm790, %v1371, %v1410
    %v1412 = vsel %vm792, %v1377, %v1411
    %v1413 = vsel %vm794, %v1383, %v1412
    %1416 = vst [vmem:[#allocation7] sm:$0xff] %v1406
    %1417 = vst [vmem:[#allocation7 + $0x8] sm:$0xff] %v1413
    // Predicated region
    $region30: #{tpu_custom_call.1} parent=1 // pred_check
      _
    $region31: #{tpu_custom_call.1} parent=1 // pred_check_branch
      %1419 = sbr.rel (0) target = $region33
    $region32: #{tpu_custom_call.1} parent=1 // pred_region
      %s1421 = ssub.s32 256, 256
      %1422 = vsyncadd [#allocation4], %s1421
      %s1423 = sshll.u32 [#allocation7], 4
      %s1424 = int_to_ptr.vmem [resolvable:$true] %s1423
      %1429 = dma.vmem_to_hbm [thread:$0]  %s1424, 256, %s5, [#allocation4], 128, 128, 8
    $region33: #{tpu_custom_call.1} parent=1 // pred_fallthru
      _
    // Predicated region
    $region34: #{tpu_custom_call.1} parent=1 // pred_check
      _
    $region35: #{tpu_custom_call.1} parent=1 // pred_check_branch
      %1431 = sbr.rel (0) target = $region37
    $region36: #{tpu_custom_call.1} parent=1 // pred_region
      %1432 = dma.done [#allocation4], 256
    $region37: #{tpu_custom_call.1} parent=1 // pred_fallthru
      _
    %1433 = vsyncpa [#allocation3], 1
    %1434 = vsyncpa [#allocation6], 1
    %1435 = vsyncpa [#allocation4], 1

</llo_original>
